<compile_context>
chip_gen: v5e
topology: v5e:2x2
jax: 0.10.0
libtpu: 0.0.40
codegen_flags: <defaults>
</compile_context>

<pallas_src>
import jax
import jax.numpy as jnp
from jax.experimental import pallas as pl
from jax.experimental.pallas import tpu as pltpu


def _round_up(n, m):
    return ((n + m - 1) // m) * m


def _cdiv(a, b):
    return (a + b - 1) // b


# ----------------------------------------------------------------------------
# Kernels
# ----------------------------------------------------------------------------
def _td_linear_kernel_single_k(x_ref, w_ref, b_ref, o_ref):
    # x_ref: (TM, D)  w_ref: (D, TN)  b_ref: (1, TN)  o_ref: (TM, TN)
    # Whole reduction in one MXU pass: no accumulator scratch, no extra
    # zero-store / load / store round trip (the vector-store slot is scarce).
    o_ref[...] = (
        jnp.dot(x_ref[...], w_ref[...], preferred_element_type=jnp.float32)
        + b_ref[...]
    ).astype(o_ref.dtype)


def _td_linear_kernel_tiled_k(x_ref, w_ref, b_ref, o_ref, acc_ref):
    # x_ref: (TM, TK)  w_ref: (TK, TN)  b_ref: (1, TN)
    # o_ref: (TM, TN)  acc_ref: (TM, TN) f32 scratch (only allocated here).
    k = pl.program_id(2)

    @pl.when(k == 0)
    def _():
        acc_ref[...] = jnp.zeros_like(acc_ref)

    acc_ref[...] += jnp.dot(
        x_ref[...], w_ref[...], preferred_element_type=jnp.float32
    )

    @pl.when(k == pl.num_programs(2) - 1)
    def _():
        # Bias add + cast once, as the epilogue of the reduction.
        o_ref[...] = (acc_ref[...] + b_ref[...]).astype(o_ref.dtype)


# ----------------------------------------------------------------------------
# Wrapper
# ----------------------------------------------------------------------------
def time_distributed_linear(x, weight, bias, *, compute_dtype=None,
                            vmem_budget_bytes=None):
    """y = TimeDistributed(Linear)(x): (B, T, D) @ (D, O) + (O,) -> (B, T, O).

    weight is (D, O) (transpose of PyTorch nn.Linear.weight); bias is (O,).
    compute_dtype: optionally jnp.bfloat16 to run the MXU in bf16 (f32 accum
    kept); default None keeps the input dtype for exact nn.Linear numerics.
    """
    B, T, D = x.shape
    O = weight.shape[1]
    M = B * T
    out_dtype = x.dtype

    if compute_dtype is not None:
        x = x.astype(compute_dtype)
        weight = weight.astype(compute_dtype)
    it_x = jnp.dtype(x.dtype).itemsize        # activations / weight
    it_o = jnp.dtype(out_dtype).itemsize      # output tile

    # ---- Generation-aware VMEM budget / limit. ----------------------------
    try:
        vmem_cap = int(pltpu.get_tpu_info().vmem_capacity_bytes)
    except Exception:
        vmem_cap = 64 * 1024 * 1024           # conservative (v7x per-core)
    # v5e/v6e (128 MiB): limit -> 100 MiB, default budget -> 64 MiB.
    # v7x (64 MiB/TC):   limit -> ~54 MiB,  default budget -> ~35 MiB.
    vmem_limit = min(int(vmem_cap * 0.85), 100 * 1024 * 1024)
    if vmem_budget_bytes is None:
        vmem_budget_bytes = min(int(vmem_cap * 0.55), 64 * 1024 * 1024)
    # Caller-raised budgets are clamped so the compiler never rejects tiles.
    vmem_budget_bytes = min(vmem_budget_bytes, int(vmem_limit * 0.85))

    # ---- N (output) tiling: lane-dense, single block unless O is huge. ----
    # (Kept at 128-multiples: this head is small-O / HBM-bound; 256-wide tiles
    #  only matter for compute-bound reuse on v6e/v7x.)
    O_pad = _round_up(O, 128)
    if O_pad <= 2048:
        TN = O_pad
    else:
        TN = 2048
        while O_pad % TN != 0:
            TN //= 2
    n_n = O_pad // TN

    # ---- K (reduction) tiling: keep all of D resident whenever it fits. ---
    tm_probe = min(128, _round_up(M, 8))

    def _vmem_needed(tm, tk, tiled_k):
        b = it_x * (2 * tm * tk + 2 * tk * TN)      # x tile + weight slice (2x buf)
        b += 4 * 2 * TN                             # bias (f32)
        b += it_o * 2 * tm * TN                     # output tile (2x buf)
        if tiled_k:
            b += 4 * tm * TN                        # f32 accumulator scratch
        return b

    if _vmem_needed(tm_probe, D, tiled_k=False) <= vmem_budget_bytes:
        TK, D_pad, n_k = D, D, 1                    # single resident K block
    else:
        # Prefer a 128-multiple TK that divides D exactly: never pad x along K.
        TK = 0
        for cand in (2048, 1024, 512, 256, 128):
            if D % cand == 0 and _vmem_needed(tm_probe, cand, True) <= vmem_budget_bytes:
                TK = cand
                break
        if TK == 0:
            # Rare fallback (D has no 128-multiple divisor that fits): this is
            # the only path that copies the activations to pad K.
            for cand in (2048, 1024, 512, 256, 128):
                if _vmem_needed(tm_probe, cand, True) <= vmem_budget_bytes:
                    TK = cand
                    break
            TK = TK or 128
        D_pad = _round_up(D, TK)
        n_k = D_pad // TK

    # ---- M (row) tiling: maximize under the budget. ------------------------
    fixed_bytes = it_x * 2 * TK * TN + 4 * 2 * TN
    per_row = it_x * 2 * TK + it_o * 2 * TN + (4 * TN if n_k > 1 else 0)
    avail = max(vmem_budget_bytes - fixed_bytes, per_row * 8)
    TM = int(avail // per_row)
    TM = min(TM, 2048)                              # big tiles OK (v7x HBM roofline)
    TM = min(TM, _round_up(M, 8))                   # never bigger than needed
    TM = min(TM, _round_up(_cdiv(M, 2), 8))         # >= 2 M tiles for v7x megacore
    TM = max(8, (TM // 8) * 8)
    n_m = _cdiv(M, TM)                              # partial last tile: masked stores

    # ---- Operand prep: pad weight/bias only; x is never copied along M. ---
    x_flat = x.reshape(M, D)
    if D_pad != D:
        x_flat = jnp.pad(x_flat, ((0, 0), (0, D_pad - D)))   # rare fallback path
    w_p = weight
    if (D_pad, O_pad) != (D, O):
        w_p = jnp.pad(weight, ((0, D_pad - D), (0, O_pad - O)))
    b_p = bias.astype(jnp.float32).reshape(1, O)
    if O_pad != O:
        b_p = jnp.pad(b_p, ((0, 0), (0, O_pad - O)))

    # ---- Cost estimate reflecting padded sizes + weight re-streaming. -----
    w_streams = n_m if (n_k > 1 or n_n > 1) else 1
    x_streams = n_n if n_k > 1 else 1
    cost = pl.CostEstimate(
        flops=2 * M * D_pad * O_pad,
        transcendentals=0,
        bytes_accessed=(it_x * (x_streams * M * D_pad + w_streams * D_pad * O_pad)
                        + it_o * M * O_pad),
    )

    # ---- Grid / specs. -----------------------------------------------------
    if n_k == 1:
        kernel = _td_linear_kernel_single_k
        grid = (n_m, n_n)
        in_specs = [
            pl.BlockSpec((TM, D_pad), lambda i, j: (i, 0)),   # activations
            pl.BlockSpec((D_pad, TN), lambda i, j: (0, j)),   # resident weight
            pl.BlockSpec((1, TN), lambda i, j: (0, j)),       # bias
        ]
        out_specs = pl.BlockSpec((TM, TN), lambda i, j: (i, j))
        scratch = []
        dims = ("parallel", "parallel")
    else:
        kernel = _td_linear_kernel_tiled_k
        grid = (n_m, n_n, n_k)                               # reduction axis last
        in_specs = [
            pl.BlockSpec((TM, TK), lambda i, j, k: (i, k)),
            pl.BlockSpec((TK, TN), lambda i, j, k: (k, j)),
            pl.BlockSpec((1, TN), lambda i, j, k: (0, j)),
        ]
        out_specs = pl.BlockSpec((TM, TN), lambda i, j, k: (i, j))
        scratch = [pltpu.VMEM((TM, TN), jnp.float32)]        # only when K-tiled
        dims = ("parallel", "parallel", "arbitrary")

    y_pad = pl.pallas_call(
        kernel,
        out_shape=jax.ShapeDtypeStruct((M, O_pad), out_dtype),
        grid_spec=pltpu.PrefetchScalarGridSpec(
            num_scalar_prefetch=0,
            grid=grid,
            in_specs=in_specs,
            out_specs=out_specs,
            scratch_shapes=scratch,
        ),
        compiler_params=pltpu.CompilerParams(
            dimension_semantics=dims,
            vmem_limit_bytes=int(vmem_limit),
        ),
        cost_estimate=cost,
    )(x_flat, w_p, b_p)

    y = y_pad if O_pad == O else y_pad[:, :O]
    return y.reshape(B, T, O)


if __name__ == "__main__":
    # Small shapes consistent with the module: batch=2, time_steps=8,
    # input_size=32, output_size=16. (At this size the kernel is launch
    # overhead; the tiling above is what matters at production sizes.)
    B, T, D, O = 2, 8, 32, 16

    key = jax.random.PRNGKey(0)
    kx, kw, kb = jax.random.split(key, 3)

    x = jax.random.normal(kx, (B, T, D), dtype=jnp.float32)
    # Deterministic synthetic parameters (not a checkpoint load).
    weight = jax.random.normal(kw, (D, O), dtype=jnp.float32) * 0.1
    bias = jax.random.normal(kb, (O,), dtype=jnp.float32) * 0.1

    y = time_distributed_linear(x, weight, bias)
    y = jax.block_until_ready(y)

    # Reference check against plain-JAX TimeDistributed(Linear).
    y_ref = (x.reshape(-1, D) @ weight + bias).reshape(B, T, O)
    assert y.shape == (B, T, O)
    assert jnp.allclose(y, y_ref, atol=1e-4, rtol=1e-4), "mismatch vs reference"

    print("KERNEL_OK")
</pallas_src>

<mosaic_0001>
module attributes {stable_mosaic.version = 11 : i64} {
  func.func @_td_linear_kernel_single_k(%arg0: i32, %arg1: i32, %arg2: memref<8x32xf32, #tpu.memory_space<vmem>>, %arg3: memref<32x128xf32, #tpu.memory_space<vmem>>, %arg4: memref<1x128xf32, #tpu.memory_space<vmem>>, %arg5: memref<8x128xf32, #tpu.memory_space<vmem>>) attributes {dimension_semantics = [#tpu.dimension_semantics<parallel>, #tpu.dimension_semantics<parallel>], iteration_bounds = array<i64: 2, 1>, scalar_prefetch = 0 : i64, scratch_operands = 0 : i64, tpu.core_type = #tpu.core_type<tc>, window_params = [{transform_indices = @transform_0, window_bounds = array<i64: 8, 32>}, {transform_indices = @transform_1, window_bounds = array<i64: 32, 128>}, {transform_indices = @transform_2, window_bounds = array<i64: 1, 128>}, {transform_indices = @transform_3, window_bounds = array<i64: 8, 128>}]} {
    %c0 = arith.constant 0 : index
    %c0_0 = arith.constant 0 : index
    %0 = vector.load %arg2[%c0, %c0_0] : memref<8x32xf32, #tpu.memory_space<vmem>>, vector<8x32xf32>
    %c0_1 = arith.constant 0 : index
    %c0_2 = arith.constant 0 : index
    %1 = vector.load %arg3[%c0_1, %c0_2] : memref<32x128xf32, #tpu.memory_space<vmem>>, vector<32x128xf32>
    %cst = arith.constant dense<0.000000e+00> : vector<8x128xf32>
    %2 = tpu.matmul %0, %1, %cst {dimension_numbers = #tpu.dot_dimension_numbers<[1], [0], [0], [1], [0, 0, 1, 1], [], []>} : vector<8x32xf32>, vector<32x128xf32>, vector<8x128xf32> -> vector<8x128xf32>
    %c0_3 = arith.constant 0 : index
    %c0_4 = arith.constant 0 : index
    %3 = vector.load %arg4[%c0_3, %c0_4] : memref<1x128xf32, #tpu.memory_space<vmem>>, vector<1x128xf32>
    %4 = vector.broadcast %3 : vector<1x128xf32> to vector<8x128xf32>
    %5 = arith.addf %2, %4 : vector<8x128xf32>
    %c0_5 = arith.constant 0 : index
    %c0_6 = arith.constant 0 : index
    %6 = vector.load %arg5[%c0_5, %c0_6] : memref<8x128xf32, #tpu.memory_space<vmem>>, vector<8x128xf32>
    tpu.vector_store %arg5[%c0_5, %c0_6], %5 {strides = array<i32>} : memref<8x128xf32, #tpu.memory_space<vmem>>, vector<8x128xf32>,
    return
  }
  func.func @transform_0(%arg0: i32, %arg1: i32) -> (i32, i32) {
    %c0_i32 = arith.constant 0 : i32
    %c0_i32_0 = arith.constant 0 : i32
    return %arg0, %c0_i32 : i32, i32
  }
  func.func @transform_1(%arg0: i32, %arg1: i32) -> (i32, i32) {
    %c0_i32 = arith.constant 0 : i32
    %c0_i32_0 = arith.constant 0 : i32
    return %c0_i32, %arg1 : i32, i32
  }
  func.func @transform_2(%arg0: i32, %arg1: i32) -> (i32, i32) {
    %c0_i32 = arith.constant 0 : i32
    %c0_i32_0 = arith.constant 0 : i32
    return %c0_i32, %arg1 : i32, i32
  }
  func.func @transform_3(%arg0: i32, %arg1: i32) -> (i32, i32) {
    %c0_i32 = arith.constant 0 : i32
    return %arg0, %arg1 : i32, i32
  }
}

</mosaic_0001>

<llo_original>
// kernel: tpu_custom_call.1
$region0: #{tpu_custom_call.1}
  #allocation0 [shape = 'u32[]', space=smem, size = 0x4, offset = 0x4, fixed_abs, tag = 'smem constant byte address 0x4 - core index']
  #allocation1 [shape = 'u32[72,128]{1,0:T(1,128)}', space=vmem, size = 0x9000, scoped, tag = 'internal scratch']
  %s0 = inlined_call_operand.hbm [shape: f32[16,32], index: 0, kind: input, shape index: {}]
  %s1 = inlined_call_operand.hbm [shape: f32[32,128], index: 1, kind: input, shape index: {}]
  %s2 = inlined_call_operand.vmem [shape: f32[1,128], index: 2, kind: input, shape index: {}]
  %s3 = inlined_call_operand.hbm [shape: f32[16,128], index: 3, kind: output, shape index: {}]
  %s4 = sld [smem:[#allocation0]]
  $region53: #{tpu_custom_call.1} parent=0
    _
  %s6 = ssub.s32 1, %s4
  %s7 = scalar_select 0, %s6, %s4
  $region1: #{tpu_custom_call.1} parent=0
    #allocation2 [shape = 'u8[8192]{0}', space=vmem, size = 0x2000, scoped, tag = 'input window, operand 0']
    #allocation3 [shape = 's32[2]{0}', space=sflag, size = 0x8, scoped, tag = 'scoped memory for tpu_custom_call.1']
    #allocation4 [shape = 's32[2]{0}', space=sflag, size = 0x8, scoped, tag = 'scoped memory for tpu_custom_call.1']
    #allocation5 [shape = 'u8[16384]{0}', space=vmem, size = 0x4000, scoped, tag = 'input window, operand 1, single buffered']
    #allocation6 [shape = 's32[1]{0}', space=sflag, size = 0x4, scoped, tag = 'scoped memory for tpu_custom_call.1']
    #allocation7 [shape = 'u8[8192]{0}', space=vmem, size = 0x2000, scoped, tag = 'output window, operand 0']
    %8 = vsyncpa [#allocation3], 0
    %s9 = scalar_lea.sflag [#allocation3], 1
    %10 = vsyncpa %s9, 0
    %11 = vsyncpa [#allocation6], 0
    %12 = vsyncpa [#allocation4], 0
    %s13 = scalar_lea.sflag [#allocation4], 1
    %14 = vsyncpa %s13, 0
    loop: start=0, step=1, limit=4
    $region2: #{tpu_custom_call.1} parent=1 // loop_pre_header
      _
    $region3: #{tpu_custom_call.1} parent=1 // loop_header
      %s16 = sphi 0, %s20
      %p17 = scmp.ge.s32.totalorder %s16, 4
      %s23 = sphi 0, %s35
      %s24 = sphi 0, %s31
      %s25 = sphi 0, %s23
      %s26 = sphi 0, %s24
      %s27 = sphi 0, %s25
      %s28 = sphi 0, %s26
      %s38 = sphi 0, %s40
      %s41 = sphi 0, %s38
      %s42 = sphi 0, %s41
      %s58 = sphi 0, %s42
      %s64 = sphi 0, %s66
      %s67 = sphi 0, %s64
      %s68 = sphi 0, %s67
      %s84 = sphi 0, %s68
      %s90 = sphi 0, %s92
      %s93 = sphi 0, %s90
      %s94 = sphi 0, %s93
      %s110 = sphi 0, %s94
      %s118 = sphi 0, %s120
      %s121 = sphi 0, %s118
      %s122 = sphi 0, %s121
      %s138 = sphi 0, %s122
    $region4: #{tpu_custom_call.1} parent=1 // loop_header_branch
      %19 = sbr.rel (%p17) target = $region8
    $region5: #{tpu_custom_call.1} parent=1 // loop_body
      %s21 = ssub.s32 %s16, 1
      %s22 = ssub.s32 %s16, 2
      %s29 = sadd.s32 1, %s24
      %p30 = scmp.ge.s32.totalorder %s29, 1
      %s31 = scalar_select %p30, 0, %s29
      %s32 = sadd.s32 1, %s23
      %s33 = scalar_select %p30, %s32, %s23
      %p34 = scmp.ge.s32.totalorder %s33, 2
      %s35 = scalar_select %p34, 0, %s33
      %s36 = ssub.s32 %s23, %s35
      %p37 = scmp.eq.s32.totalorder %s36, 0
      %s39 = sadd.s32 %s38, 1
      %s40 = scalar_select %p37, %s38, %s39
      %p43 = pneg %p37
      %p44 = scmp.eq.s32.totalorder %s16, 1
      %p45 = por %p43, %p44
      %p46 = scmp.ne.s32.totalorder %s38, %s41
      %p47 = scmp.eq.s32.totalorder %s16, 0
      %p48 = por %p46, %p47
      %p49 = scmp.ne.s32.totalorder %s38, %s41
      %p50 = scmp.eq.s32.totalorder %s21, 1
      %p51 = por %p49, %p50
      %p52 = scmp.ne.s32.totalorder %s41, %s42
      %p53 = scmp.eq.s32.totalorder %s21, 0
      %p54 = por %p52, %p53
      %p55 = scmp.ne.s32.totalorder %s41, %s42
      %p56 = scmp.eq.s32.totalorder %s22, 1
      %p57 = por %p55, %p56
      %p59 = scmp.ne.s32.totalorder %s42, %s58
      %p60 = scmp.eq.s32.totalorder %s22, 0
      %p61 = por %p59, %p60
      %s62 = ssub.s32 %s24, %s31
      %p63 = scmp.eq.s32.totalorder %s62, 0
      %s65 = sadd.s32 %s64, 1
      %s66 = scalar_select %p63, %s64, %s65
      %p69 = pneg %p63
      %p70 = scmp.eq.s32.totalorder %s16, 1
      %p71 = por %p69, %p70
      %p72 = scmp.ne.s32.totalorder %s64, %s67
      %p73 = scmp.eq.s32.totalorder %s16, 0
      %p74 = por %p72, %p73
      %p75 = scmp.ne.s32.totalorder %s64, %s67
      %p76 = scmp.eq.s32.totalorder %s21, 1
      %p77 = por %p75, %p76
      %p78 = scmp.ne.s32.totalorder %s67, %s68
      %p79 = scmp.eq.s32.totalorder %s21, 0
      %p80 = por %p78, %p79
      %p81 = scmp.ne.s32.totalorder %s67, %s68
      %p82 = scmp.eq.s32.totalorder %s22, 1
      %p83 = por %p81, %p82
      %p85 = scmp.ne.s32.totalorder %s68, %s84
      %p86 = scmp.eq.s32.totalorder %s22, 0
      %p87 = por %p85, %p86
      %s88 = ssub.s32 %s24, %s31
      %p89 = scmp.eq.s32.totalorder %s88, 0
      %s91 = sadd.s32 %s90, 1
      %s92 = scalar_select %p89, %s90, %s91
      %p95 = pneg %p89
      %p96 = scmp.eq.s32.totalorder %s16, 1
      %p97 = por %p95, %p96
      %p98 = scmp.ne.s32.totalorder %s90, %s93
      %p99 = scmp.eq.s32.totalorder %s16, 0
      %p100 = por %p98, %p99
      %p101 = scmp.ne.s32.totalorder %s90, %s93
      %p102 = scmp.eq.s32.totalorder %s21, 1
      %p103 = por %p101, %p102
      %p104 = scmp.ne.s32.totalorder %s93, %s94
      %p105 = scmp.eq.s32.totalorder %s21, 0
      %p106 = por %p104, %p105
      %p107 = scmp.ne.s32.totalorder %s93, %s94
      %p108 = scmp.eq.s32.totalorder %s22, 1
      %p109 = por %p107, %p108
      %p111 = scmp.ne.s32.totalorder %s94, %s110
      %p112 = scmp.eq.s32.totalorder %s22, 0
      %p113 = por %p111, %p112
      %s114 = ssub.s32 %s23, %s35
      %s115 = ssub.s32 %s24, %s31
      %s116 = sor.u32 %s114, %s115
      %p117 = scmp.eq.s32.totalorder %s116, 0
      %s119 = sadd.s32 %s118, 1
      %s120 = scalar_select %p117, %s118, %s119
      %p123 = pneg %p117
      %p124 = scmp.eq.s32.totalorder %s16, 1
      %p125 = por %p123, %p124
      %p126 = scmp.ne.s32.totalorder %s118, %s121
      %p127 = scmp.eq.s32.totalorder %s16, 0
      %p128 = por %p126, %p127
      %p129 = scmp.ne.s32.totalorder %s118, %s121
      %p130 = scmp.eq.s32.totalorder %s21, 1
      %p131 = por %p129, %p130
      %p132 = scmp.ne.s32.totalorder %s121, %s122
      %p133 = scmp.eq.s32.totalorder %s21, 0
      %p134 = por %p132, %p133
      %p135 = scmp.ne.s32.totalorder %s121, %s122
      %p136 = scmp.eq.s32.totalorder %s22, 1
      %p137 = por %p135, %p136
      %p139 = scmp.ne.s32.totalorder %s122, %s138
      %p140 = scmp.eq.s32.totalorder %s22, 0
      %p141 = por %p139, %p140
      %p142 = scmp.le.s32.totalorder 1, %s16
      %p143 = scmp.lt.s32.totalorder %s16, 3
      %p144 = pnand %p142, %p143
      %p145 = pneg %p144
      // Predicated region
      $region9: #{tpu_custom_call.1} parent=5 // pred_check
        _
      $region10: #{tpu_custom_call.1} parent=5 // pred_check_branch
        %147 = sbr.rel (%p144) target = $region12
      $region11: #{tpu_custom_call.1} parent=5 // pred_region
        %s148 = ssub.s32 %s16, 1
        // Predicated region
        $region13: #{tpu_custom_call.1} parent=11 // pred_check
          %p149 = pneg %p80
        $region14: #{tpu_custom_call.1} parent=11 // pred_check_branch
          %151 = sbr.rel (%p149) target = $region16
        $region15: #{tpu_custom_call.1} parent=11 // pred_region
          %153 = vsyncadd [#allocation6], 0
          %s154 = smul.addr %s26, 8
          %s155 = scalar_lea.hbm %s1, %s154
          %s156 = sshll.u32 %s155, 4
          %s157 = int_to_ptr.hbm [resolvable:$true] %s156
          %s158 = sshll.u32 [#allocation5], 4
          %s159 = int_to_ptr.vmem [resolvable:$true] %s158
          %164 = dma.hbm_to_vmem [thread:$0]  %s157, 512, %s159, [#allocation6], 128, 128, 8
        $region16: #{tpu_custom_call.1} parent=11 // pred_fallthru
          _
        // Predicated region
        $region17: #{tpu_custom_call.1} parent=11 // pred_check
          %p165 = pneg %p106
        $region18: #{tpu_custom_call.1} parent=11 // pred_check_branch
          %167 = sbr.rel (%p165) target = $region20
        $region19: #{tpu_custom_call.1} parent=11 // pred_region
          %p168 = scmp.lt.s32.totalorder %s26, 0
          %s169 = scalar_select %p168, %s26, 0
          %s170 = scalar_lea.vmem %s2, %s169
        $region20: #{tpu_custom_call.1} parent=11 // pred_fallthru
          _
      $region12: #{tpu_custom_call.1} parent=5 // pred_fallthru
        _
      %p171 = scmp.lt.s32.totalorder %s16, 2
      // Predicated region
      $region21: #{tpu_custom_call.1} parent=5 // pred_check
        %p172 = pneg %p171
      $region22: #{tpu_custom_call.1} parent=5 // pred_check_branch
        %174 = sbr.rel (%p172) target = $region24
      $region23: #{tpu_custom_call.1} parent=5 // pred_region
        // Predicated region
        $region25: #{tpu_custom_call.1} parent=23 // pred_check
          %p175 = pneg %p48
        $region26: #{tpu_custom_call.1} parent=23 // pred_check_branch
          %177 = sbr.rel (%p175) target = $region28
        $region27: #{tpu_custom_call.1} parent=23 // pred_region
          %s178 = sand.u32 %s38, 1
          %s179 = scalar_lea.sflag [#allocation3], %s178
          %s180 = sand.u32 %s38, 1
          %s181 = smul.addr %s180, 8
          %s182 = scalar_lea.vmem [#allocation2], %s181
          %184 = vsyncadd %s179, 0
          %s185 = smul.addr %s23, 8
          %s186 = scalar_lea.hbm %s0, %s185
          %s188 = sshll.u32 %s186, 4
          %s189 = int_to_ptr.hbm [resolvable:$true] %s188
          %s190 = sshll.u32 %s182, 4
          %s191 = int_to_ptr.vmem [resolvable:$true] %s190
          %193 = dma.hbm_to_vmem [thread:$0]  %s189, 128, %s191, %s179
        $region28: #{tpu_custom_call.1} parent=23 // pred_fallthru
          _
      $region24: #{tpu_custom_call.1} parent=5 // pred_fallthru
        _
      %p194 = scmp.le.s32.totalorder 1, %s16
      %p195 = scmp.lt.s32.totalorder %s16, 3
      %p196 = pnand %p194, %p195
      %p197 = pneg %p196
      // Predicated region
      $region29: #{tpu_custom_call.1} parent=5 // pred_check
        _
      $region30: #{tpu_custom_call.1} parent=5 // pred_check_branch
        %199 = sbr.rel (%p196) target = $region32
      $region31: #{tpu_custom_call.1} parent=5 // pred_region
        %s200 = ssub.s32 %s16, 1
        %s201 = sand.u32 %s41, 1
        %s202 = scalar_lea.sflag [#allocation3], %s201
        %s203 = sand.u32 %s41, 1
        %s204 = smul.addr %s203, 8
        %s205 = scalar_lea.vmem [#allocation2], %s204
        // Predicated region
        $region33: #{tpu_custom_call.1} parent=31 // pred_check
          %p206 = pneg %p54
        $region34: #{tpu_custom_call.1} parent=31 // pred_check_branch
          %208 = sbr.rel (%p206) target = $region36
        $region35: #{tpu_custom_call.1} parent=31 // pred_region
          %210 = dma.done %s202, 128
        $region36: #{tpu_custom_call.1} parent=31 // pred_fallthru
          _
        // Predicated region
        $region37: #{tpu_custom_call.1} parent=31 // pred_check
          %p211 = pneg %p80
        $region38: #{tpu_custom_call.1} parent=31 // pred_check_branch
          %213 = sbr.rel (%p211) target = $region40
        $region39: #{tpu_custom_call.1} parent=31 // pred_region
          %215 = dma.done [#allocation6], 512
        $region40: #{tpu_custom_call.1} parent=31 // pred_fallthru
          _
        %s216 = sand.u32 %s41, 1
        %s217 = scalar_lea.sflag [#allocation3], %s216
        %s218 = sand.u32 %s41, 1
        %s219 = smul.addr %s218, 8
        %s220 = scalar_lea.vmem [#allocation2], %s219
        %p221 = pneg %p54
        %p222 = pneg %p51
        %p223 = pneg %p80
        %p224 = pneg %p77
        %p225 = scmp.lt.s32.totalorder %s26, 0
        %s226 = scalar_select %p225, %s26, 0
        %s227 = scalar_lea.vmem %s2, %s226
        %p228 = pneg %p106
        %p229 = pneg %p103
        %p230 = pneg %p134
        %p231 = pneg %p131
        %s232 = sand.u32 %s121, 1
        %s233 = scalar_lea.sflag [#allocation4], %s232
        %s234 = sand.u32 %s121, 1
        %s235 = smul.addr %s234, 8
        %s236 = scalar_lea.vmem [#allocation7], %s235
        %p237 = scmp.lt.s32.totalorder %s26, 0
        %s238 = scalar_select %p237, %s26, 0
        %s239 = scalar_lea.vmem %s2, %s238
        %v240 = vld [vmem:[%s205] sm:$0xff]
        %v241 = vld [vmem:[#allocation5] sm:$0xff]
        %v242 = vld [vmem:[#allocation5 + $0x8] sm:$0xff]
        %v243 = vld [vmem:[#allocation5 + $0x10] sm:$0xff]
        %v244 = vld [vmem:[#allocation5 + $0x18] sm:$0xff]
        %v245 = vld [vmem:[%s239] sm:$0x1]
        %v247 = vperm.slane %v245, 0
        %vm249 = vcmask 261120
        %v251 = vsel %vm249, %v240, 0
        %253 = vmatpush.msra.mxu0 0.0
        %254 = vmatpush.msra.mxu0 0.0
        %255 = vmatpush.msra.mxu0 0.0
        %256 = vmatpush.msra.mxu0 0.0
        %257 = vmatpush.msra.mxu0 0.0
        %258 = vmatpush.msra.mxu0 0.0
        %259 = vmatpush.msra.mxu0 0.0
        %260 = vmatpush.msra.mxu0 0.0
        %261 = vmatpush.msra.mxu0 0.0
        %262 = vmatpush.msra.mxu0 0.0
        %263 = vmatpush.msra.mxu0 0.0
        %264 = vmatpush.msra.mxu0 0.0
        %265 = vmatpush.msra.mxu0 %v244
        %266 = vmatpush.msra.mxu0 %v243
        %267 = vmatpush.msra.mxu0 %v242
        %268 = vmatpush.msra.mxu0 %v241
        %269 = vmatmul.f32.gmra.mxu0 %v251
        %v270 = vpop.f32.mrf.mxu0
        %v271 = vadd.f32 %v247, %v270
        %272 = vdwg.mxu0
        %273 = vst [vmem:[%s236] sm:$0xff] %v271
        %s274 = sand.u32 %s121, 1
        %s275 = scalar_lea.sflag [#allocation4], %s274
        %s276 = sand.u32 %s121, 1
        %s277 = smul.addr %s276, 8
        %s278 = scalar_lea.vmem [#allocation7], %s277
        // Predicated region
        $region41: #{tpu_custom_call.1} parent=31 // pred_check
          %p279 = pneg %p131
        $region42: #{tpu_custom_call.1} parent=31 // pred_check_branch
          %281 = sbr.rel (%p279) target = $region44
        $region43: #{tpu_custom_call.1} parent=31 // pred_region
          %283 = vsyncadd %s275, 0
          %s284 = sadd.s32 %s26, %s25
          %s285 = smul.addr %s284, 8
          %s286 = scalar_lea.hbm %s3, %s285
          %s288 = sshll.u32 %s278, 4
          %s289 = int_to_ptr.vmem [resolvable:$true] %s288
          %s290 = sshll.u32 %s286, 4
          %s291 = int_to_ptr.hbm [resolvable:$true] %s290
          %293 = dma.vmem_to_hbm [thread:$0]  %s289, 128, %s291, %s275
        $region44: #{tpu_custom_call.1} parent=31 // pred_fallthru
          _
      $region32: #{tpu_custom_call.1} parent=5 // pred_fallthru
        _
      %p294 = scmp.le.s32.totalorder 2, %s16
      // Predicated region
      $region45: #{tpu_custom_call.1} parent=5 // pred_check
        %p295 = pneg %p294
      $region46: #{tpu_custom_call.1} parent=5 // pred_check_branch
        %297 = sbr.rel (%p295) target = $region48
      $region47: #{tpu_custom_call.1} parent=5 // pred_region
        %s298 = ssub.s32 %s16, 2
        // Predicated region
        $region49: #{tpu_custom_call.1} parent=47 // pred_check
          %p299 = pneg %p137
        $region50: #{tpu_custom_call.1} parent=47 // pred_check_branch
          %301 = sbr.rel (%p299) target = $region52
        $region51: #{tpu_custom_call.1} parent=47 // pred_region
          %s302 = sand.u32 %s122, 1
          %s303 = scalar_lea.sflag [#allocation4], %s302
          %s304 = sand.u32 %s122, 1
          %s305 = smul.addr %s304, 8
          %s306 = scalar_lea.vmem [#allocation7], %s305
          %308 = dma.done %s303, 128
        $region52: #{tpu_custom_call.1} parent=47 // pred_fallthru
          _
      $region48: #{tpu_custom_call.1} parent=5 // pred_fallthru
        _
    $region6: #{tpu_custom_call.1} parent=1 // loop_footer
      %s20 = sadd.s32 1, %s16
    $region7: #{tpu_custom_call.1} parent=1 // loop_footer_branch
      %15 = sbr.rel target = $region3
    $region8: #{tpu_custom_call.1} parent=1 // loop_exit
      _
    %309 = vsyncpa [#allocation3], 1
    %s310 = scalar_lea.sflag [#allocation3], 1
    %311 = vsyncpa %s310, 1
    %312 = vsyncpa [#allocation6], 1
    %313 = vsyncpa [#allocation4], 1
    %s314 = scalar_lea.sflag [#allocation4], 1
    %315 = vsyncpa %s314, 1

</llo_original>
